<compile_context>
chip_gen: v6e
topology: v6e:2x2x1
jax: 0.10.0
libtpu: 0.0.40
codegen_flags: <defaults>
</compile_context>

<pallas_src>
import functools

import jax
import jax.numpy as jnp
from jax.experimental import pallas as pl
from jax.experimental.pallas import tpu as pltpu


def _round_up(x: int, m: int) -> int:
    return -(-x // m) * m


def _cdiv(a: int, b: int) -> int:
    return -(-a // b)


def _spec(shape, index_map, nbuf=None):
    """BlockSpec helper; requests nbuf-deep buffering when supported."""
    if nbuf is not None and hasattr(pl, "Buffered"):
        try:
            return pl.BlockSpec(shape, index_map, pipeline_mode=pl.Buffered(nbuf))
        except TypeError:
            pass
    return pl.BlockSpec(shape, index_map)


def _vmem_capacity_bytes() -> int:
    try:
        return int(pltpu.get_tpu_info().vmem_capacity_bytes)
    except Exception:
        return 64 * 1024 * 1024  # conservative (v7x per-core)


def _mlp_kernel_single(x_ref, w1_ref, b1_ref, w2_ref, b2_ref, o_ref):
    """Whole hidden dim resident: one (tm, D) row tile per grid step."""
    # in-kernel cast: x arrives f32 from HBM, VPU cast is hidden under the MXU
    x = x_ref[...].astype(jnp.bfloat16)
    h = jnp.dot(x, w1_ref[...], preferred_element_type=jnp.float32) + b1_ref[...]
    # matches torch nn.GELU(approximate='tanh'); exact-erf GELU differs ~1e-3
    h = jax.nn.gelu(h, approximate=True)
    y = jnp.dot(h.astype(w2_ref.dtype), w2_ref[...],
                preferred_element_type=jnp.float32)
    o_ref[...] = (y + b2_ref[...]).astype(o_ref.dtype)


def _mlp_kernel_chunked(x_ref, w1_ref, b1_ref, w2_ref, b2_ref, o_ref, acc_ref):
    """Large H: grid axis 1 iterates 128/256-aligned H chunks (reduction)."""
    k = pl.program_id(1)

    @pl.when(k == 0)
    def _():
        acc_ref[...] = jnp.zeros_like(acc_ref)

    x = x_ref[...].astype(jnp.bfloat16)
    h = jnp.dot(x, w1_ref[...], preferred_element_type=jnp.float32) + b1_ref[...]
    h = jax.nn.gelu(h, approximate=True)  # per-chunk GELU is exact (zero-padded cols)
    acc_ref[...] += jnp.dot(h.astype(w2_ref.dtype), w2_ref[...],
                            preferred_element_type=jnp.float32)

    @pl.when(k == pl.num_programs(1) - 1)
    def _():
        o_ref[...] = (acc_ref[...] + b2_ref[...]).astype(o_ref.dtype)


@functools.partial(jax.jit, static_argnames=("tile_m", "h_chunk"))
def map_over_time_mlp(x, w1, b1, w2, b2, *, tile_m=512, h_chunk=2048):
    """MapOverTime(MLP): apply the MLP independently to every (b, t) element.

    x: (B, T, D) -> returns (B, T, Dout)
    """
    B, T, D = x.shape
    H = w1.shape[1]
    Dout = w2.shape[1]
    out_dtype = x.dtype

    # --- MapOverTime.forward: flatten batch and time dims (reshape glue) ----
    M = B * T
    xf = x.reshape(M, D)

    b1 = b1.reshape(1, -1).astype(jnp.float32)
    b2 = b2.reshape(1, -1).astype(jnp.float32)

    # --- lane-dense feature dims (pads only when needed; exact math) --------
    LANE = 128
    Dp, Dop = _round_up(D, LANE), _round_up(Dout, LANE)
    Hp0 = _round_up(H, LANE)

    # Hidden chunking: single resident chunk when H fits, else 256-aligned
    # chunks (2x256x256 MXU on v6e/v7x wants >=256-wide contraction slabs).
    if Hp0 <= h_chunk:
        hc, Hp = Hp0, Hp0
    else:
        hc = max(256, (h_chunk // 256) * 256)
        Hp = _round_up(Hp0, hc)
    num_h = Hp // hc

    if Dp != D:
        xf = jnp.pad(xf, ((0, 0), (0, Dp - D)))
        w1 = jnp.pad(w1, ((0, Dp - D), (0, 0)))
    if Hp != H:
        w1 = jnp.pad(w1, ((0, 0), (0, Hp - H)))
        b1 = jnp.pad(b1, ((0, 0), (0, Hp - H)))
        w2 = jnp.pad(w2, ((0, Hp - H), (0, 0)))
    if Dop != Dout:
        w2 = jnp.pad(w2, ((0, 0), (0, Dop - Dout)))
        b2 = jnp.pad(b2, ((0, 0), (0, Dop - Dout)))

    # Weights to bf16 for the MXU (tiny one-time pass over parameters only;
    # the activation x stays f32 and is cast inside the kernel).
    w1 = w1.astype(jnp.bfloat16)
    w2 = w2.astype(jnp.bfloat16)

    # --- VMEM-budgeted, generation-aware row tile ----------------------------
    vmem_cap = _vmem_capacity_bytes()
    VMEM_BUDGET = int(0.60 * vmem_cap)
    vmem_limit = min(int(0.75 * vmem_cap), 128 * 1024 * 1024)

    x_bpe = jnp.dtype(xf.dtype).itemsize
    out_bpe = jnp.dtype(out_dtype).itemsize
    w_nbuf = 1 if num_h == 1 else 2  # constant index maps => single-buffered

    def _vmem_bytes(tm_):
        x_bytes = 2 * tm_ * Dp * x_bpe                  # double-buffered x tile (f32)
        o_bytes = 2 * tm_ * Dop * out_bpe               # double-buffered out tile
        w_bytes = w_nbuf * (Dp * hc + hc * Dop) * 2     # bf16 weight chunk(s)
        bias_bytes = w_nbuf * hc * 4 + Dop * 4
        acc_bytes = tm_ * Dop * 4                       # accumulator / y
        hid_bytes = tm_ * hc * 4 + tm_ * hc * 2         # f32 hidden + bf16 cast
        return x_bytes + o_bytes + w_bytes + bias_bytes + acc_bytes + hid_bytes

    ROW_ALIGN = 8
    if M <= ROW_ALIGN:
        tm = M
    else:
        tm = min(_round_up(tile_m, ROW_ALIGN), _round_up(M, ROW_ALIGN))
        # >=2 row tiles so both v7x TensorCores get work (rows independent).
        tm = min(tm, _round_up(_cdiv(M, 2), ROW_ALIGN))
        while tm > ROW_ALIGN and _vmem_bytes(tm) > VMEM_BUDGET:
            tm = max(ROW_ALIGN, _round_up(tm // 2, ROW_ALIGN))

    num_row_tiles = _cdiv(M, tm)

    cost = pl.CostEstimate(
        flops=int(2 * M * (Dp * Hp + Hp * Dop)),
        transcendentals=int(M * Hp),
        bytes_accessed=int(M * Dp * x_bpe + M * Dop * out_bpe
                           + num_row_tiles * (Dp * Hp + Hp * Dop) * 2
                           + (Hp + Dop) * 4),
    )

    if num_h == 1:
        kernel = _mlp_kernel_single
        grid = (num_row_tiles,)
        in_specs = [
            _spec((tm, Dp), lambda i: (i, 0)),
            _spec((Dp, Hp), lambda i: (0, 0), nbuf=1),   # W1 resident, single-buffered
            _spec((1, Hp), lambda i: (0, 0), nbuf=1),    # b1
            _spec((Hp, Dop), lambda i: (0, 0), nbuf=1),  # W2 resident, single-buffered
            _spec((1, Dop), lambda i: (0, 0), nbuf=1),   # b2
        ]
        out_specs = _spec((tm, Dop), lambda i: (i, 0))
        scratch_shapes = []
        dims = ("parallel",)
    else:
        kernel = _mlp_kernel_chunked
        grid = (num_row_tiles, num_h)                    # reduction axis last
        in_specs = [
            _spec((tm, Dp), lambda i, k: (i, 0)),
            _spec((Dp, hc), lambda i, k: (0, k)),        # W1 chunk (pipelined)
            _spec((1, hc), lambda i, k: (0, k)),         # b1 chunk
            _spec((hc, Dop), lambda i, k: (k, 0)),       # W2 chunk (pipelined)
            _spec((1, Dop), lambda i, k: (0, 0), nbuf=1),
        ]
        out_specs = _spec((tm, Dop), lambda i, k: (i, 0))
        scratch_shapes = [pltpu.VMEM((tm, Dop), jnp.float32)]
        dims = ("parallel", "arbitrary")

    # Row dim is NOT padded: Pallas handles the ragged last block; garbage
    # rows never materialize because the output only has M rows.
    yf = pl.pallas_call(
        kernel,
        out_shape=jax.ShapeDtypeStruct((M, Dop), out_dtype),
        grid_spec=pltpu.PrefetchScalarGridSpec(
            num_scalar_prefetch=0,
            grid=grid,
            in_specs=in_specs,
            out_specs=out_specs,
            scratch_shapes=scratch_shapes,
        ),
        compiler_params=pltpu.CompilerParams(
            dimension_semantics=dims,
            vmem_limit_bytes=vmem_limit,
        ),
        cost_estimate=cost,
    )(xf, w1, b1, w2, b2)

    # --- strip feature padding, unflatten back to (B, T, ...) ---------------
    return yf[:, :Dout].reshape(B, T, Dout)


def _reference(x, w1, b1, w2, b2):
    """Plain-JAX reference mirroring the kernel's bf16-MXU / f32-accum math."""
    B, T, D = x.shape
    xf = x.reshape(B * T, D).astype(jnp.bfloat16)
    h = jnp.dot(xf, w1.astype(jnp.bfloat16), preferred_element_type=jnp.float32)
    h = h + b1.reshape(1, -1).astype(jnp.float32)
    h = jax.nn.gelu(h, approximate=True)
    y = jnp.dot(h.astype(jnp.bfloat16), w2.astype(jnp.bfloat16),
                preferred_element_type=jnp.float32)
    y = y + b2.reshape(1, -1).astype(jnp.float32)
    return y.astype(x.dtype).reshape(B, T, w2.shape[1])


if __name__ == "__main__":
    # Small but lane-dense shapes: batch=2, seq=8, D=128, H=256, Dout=128.
    B, T, D, H, Dout = 2, 8, 128, 256, 128
    key = jax.random.PRNGKey(0)
    kx, k1, k2, k3, k4 = jax.random.split(key, 5)

    x = jax.random.normal(kx, (B, T, D), dtype=jnp.float32)
    # Deterministic synthetic parameter init (no checkpoint load).
    w1 = jax.random.normal(k1, (D, H), dtype=jnp.float32) * (1.0 / D**0.5)
    b1 = jax.random.normal(k2, (1, H), dtype=jnp.float32) * 0.01
    w2 = jax.random.normal(k3, (H, Dout), dtype=jnp.float32) * (1.0 / H**0.5)
    b2 = jax.random.normal(k4, (1, Dout), dtype=jnp.float32) * 0.01

    y = map_over_time_mlp(x, w1, b1, w2, b2)
    y = jax.block_until_ready(y)

    y_ref = _reference(x, w1, b1, w2, b2)
    assert y.shape == (B, T, Dout)
    assert jnp.allclose(y, y_ref, atol=5e-3, rtol=5e-3), "mismatch vs reference"

    print("KERNEL_OK")
</pallas_src>

<mosaic_0001>
module attributes {stable_mosaic.version = 11 : i64} {
  func.func @_mlp_kernel_single(%arg0: i32, %arg1: memref<8x128xf32, #tpu.memory_space<vmem>>, %arg2: memref<128x256xbf16, #tpu.memory_space<vmem>>, %arg3: memref<1x256xf32, #tpu.memory_space<vmem>>, %arg4: memref<256x128xbf16, #tpu.memory_space<vmem>>, %arg5: memref<1x128xf32, #tpu.memory_space<vmem>>, %arg6: memref<8x128xf32, #tpu.memory_space<vmem>>) attributes {dimension_semantics = [#tpu.dimension_semantics<parallel>], iteration_bounds = array<i64: 2>, scalar_prefetch = 0 : i64, scratch_operands = 0 : i64, tpu.core_type = #tpu.core_type<tc>, window_params = [{transform_indices = @transform_0, window_bounds = array<i64: 8, 128>}, {pipeline_mode = #tpu.pipeline_mode<synchronous>, transform_indices = @transform_1, window_bounds = array<i64: 128, 256>}, {pipeline_mode = #tpu.pipeline_mode<synchronous>, transform_indices = @transform_2, window_bounds = array<i64: 1, 256>}, {pipeline_mode = #tpu.pipeline_mode<synchronous>, transform_indices = @transform_3, window_bounds = array<i64: 256, 128>}, {pipeline_mode = #tpu.pipeline_mode<synchronous>, transform_indices = @transform_4, window_bounds = array<i64: 1, 128>}, {transform_indices = @transform_5, window_bounds = array<i64: 8, 128>}]} {
    %c0 = arith.constant 0 : index
    %c0_0 = arith.constant 0 : index
    %0 = vector.load %arg1[%c0, %c0_0] : memref<8x128xf32, #tpu.memory_space<vmem>>, vector<8x128xf32>
    %1 = arith.truncf %0 : vector<8x128xf32> to vector<8x128xbf16>
    %c0_1 = arith.constant 0 : index
    %c0_2 = arith.constant 0 : index
    %2 = vector.load %arg2[%c0_1, %c0_2] : memref<128x256xbf16, #tpu.memory_space<vmem>>, vector<128x256xbf16>
    %cst = arith.constant dense<0.000000e+00> : vector<8x256xf32>
    %3 = tpu.matmul %1, %2, %cst {dimension_numbers = #tpu.dot_dimension_numbers<[1], [0], [0], [1], [0, 0, 1, 1], [], []>} : vector<8x128xbf16>, vector<128x256xbf16>, vector<8x256xf32> -> vector<8x256xf32>
    %c0_3 = arith.constant 0 : index
    %c0_4 = arith.constant 0 : index
    %4 = vector.load %arg3[%c0_3, %c0_4] : memref<1x256xf32, #tpu.memory_space<vmem>>, vector<1x256xf32>
    %5 = vector.broadcast %4 : vector<1x256xf32> to vector<8x256xf32>
    %6 = arith.addf %3, %5 : vector<8x256xf32>
    %7 = arith.mulf %6, %6 : vector<8x256xf32>
    %8 = arith.mulf %6, %7 : vector<8x256xf32>
    %cst_5 = arith.constant 4.471500e-02 : f32
    %9 = vector.broadcast %cst_5 : f32 to vector<8x256xf32>
    %10 = arith.mulf %9, %8 : vector<8x256xf32>
    %11 = arith.addf %6, %10 : vector<8x256xf32>
    %cst_6 = arith.constant 0.797884583 : f32
    %12 = vector.broadcast %cst_6 : f32 to vector<8x256xf32>
    %13 = arith.mulf %12, %11 : vector<8x256xf32>
    %14 = math.tanh %13 : vector<8x256xf32>
    %cst_7 = arith.constant 1.000000e+00 : f32
    %15 = vector.broadcast %cst_7 : f32 to vector<8x256xf32>
    %16 = arith.addf %15, %14 : vector<8x256xf32>
    %cst_8 = arith.constant 5.000000e-01 : f32
    %17 = vector.broadcast %cst_8 : f32 to vector<8x256xf32>
    %18 = arith.mulf %17, %16 : vector<8x256xf32>
    %19 = arith.mulf %6, %18 : vector<8x256xf32>
    %20 = arith.truncf %19 : vector<8x256xf32> to vector<8x256xbf16>
    %c0_9 = arith.constant 0 : index
    %c0_10 = arith.constant 0 : index
    %21 = vector.load %arg4[%c0_9, %c0_10] : memref<256x128xbf16, #tpu.memory_space<vmem>>, vector<256x128xbf16>
    %cst_11 = arith.constant dense<0.000000e+00> : vector<8x128xf32>
    %22 = tpu.matmul %20, %21, %cst_11 {dimension_numbers = #tpu.dot_dimension_numbers<[1], [0], [0], [1], [0, 0, 1, 1], [], []>} : vector<8x256xbf16>, vector<256x128xbf16>, vector<8x128xf32> -> vector<8x128xf32>
    %c0_12 = arith.constant 0 : index
    %c0_13 = arith.constant 0 : index
    %23 = vector.load %arg5[%c0_12, %c0_13] : memref<1x128xf32, #tpu.memory_space<vmem>>, vector<1x128xf32>
    %24 = vector.broadcast %23 : vector<1x128xf32> to vector<8x128xf32>
    %25 = arith.addf %22, %24 : vector<8x128xf32>
    %c0_14 = arith.constant 0 : index
    %c0_15 = arith.constant 0 : index
    %26 = vector.load %arg6[%c0_14, %c0_15] : memref<8x128xf32, #tpu.memory_space<vmem>>, vector<8x128xf32>
    tpu.vector_store %arg6[%c0_14, %c0_15], %25 {strides = array<i32>} : memref<8x128xf32, #tpu.memory_space<vmem>>, vector<8x128xf32>,
    return
  }
  func.func @transform_0(%arg0: i32) -> (i32, i32) {
    %c0_i32 = arith.constant 0 : i32
    %c0_i32_0 = arith.constant 0 : i32
    return %arg0, %c0_i32 : i32, i32
  }
  func.func @transform_1(%arg0: i32) -> (i32, i32) {
    %c0_i32 = arith.constant 0 : i32
    %c0_i32_0 = arith.constant 0 : i32
    %c0_i32_1 = arith.constant 0 : i32
    return %c0_i32, %c0_i32_0 : i32, i32
  }
  func.func @transform_2(%arg0: i32) -> (i32, i32) {
    %c0_i32 = arith.constant 0 : i32
    %c0_i32_0 = arith.constant 0 : i32
    %c0_i32_1 = arith.constant 0 : i32
    return %c0_i32, %c0_i32_0 : i32, i32
  }
  func.func @transform_3(%arg0: i32) -> (i32, i32) {
    %c0_i32 = arith.constant 0 : i32
    %c0_i32_0 = arith.constant 0 : i32
    %c0_i32_1 = arith.constant 0 : i32
    return %c0_i32, %c0_i32_0 : i32, i32
  }
  func.func @transform_4(%arg0: i32) -> (i32, i32) {
    %c0_i32 = arith.constant 0 : i32
    %c0_i32_0 = arith.constant 0 : i32
    %c0_i32_1 = arith.constant 0 : i32
    return %c0_i32, %c0_i32_0 : i32, i32
  }
  func.func @transform_5(%arg0: i32) -> (i32, i32) {
    %c0_i32 = arith.constant 0 : i32
    %c0_i32_0 = arith.constant 0 : i32
    return %arg0, %c0_i32 : i32, i32
  }
}

</mosaic_0001>

<llo_original>
// kernel: map_over_time_mlp.1
$region0: #{map_over_time_mlp.1}
  #allocation0 [shape = 'u32[]', space=smem, size = 0x4, offset = 0x4, fixed_abs, tag = 'smem constant byte address 0x4 - core index']
  #allocation1 [shape = 'u32[144,128]{1,0:T(1,128)}', space=vmem, size = 0x12000, scoped, tag = 'internal scratch']
  %s0 = inlined_call_operand.vmem [shape: f32[16,128], index: 0, kind: input, shape index: {}]
  %s1 = inlined_call_operand.vmem [shape: bf16[128,256], index: 1, kind: input, shape index: {}]
  %s2 = inlined_call_operand.vmem [shape: f32[1,256], index: 2, kind: input, shape index: {}]
  %s3 = inlined_call_operand.vmem [shape: bf16[256,128], index: 3, kind: input, shape index: {}]
  %s4 = inlined_call_operand.vmem [shape: f32[1,128], index: 4, kind: input, shape index: {}]
  %s5 = inlined_call_operand.hbm [shape: f32[16,128], index: 5, kind: output, shape index: {}]
  %s6 = sld [smem:[#allocation0]]
  $region53: #{map_over_time_mlp.1} parent=0
    _
  %s8 = ssub.s32 1, %s6
  %s9 = scalar_select 0, %s8, %s6
  $region1: #{map_over_time_mlp.1} parent=0
    #allocation2 [shape = 'u8[8192]{0}', space=vmem, size = 0x2000, scoped, tag = 'output window, operand 0']
    #allocation3 [shape = 's32[2]{0}', space=sflag, size = 0x8, scoped, tag = 'scoped memory for map_over_time_mlp.1']
    %10 = vsyncpa [#allocation3], 0
    %s11 = scalar_lea.sflag [#allocation3], 1
    %12 = vsyncpa %s11, 0
    loop: start=0, step=1, limit=4
    $region2: #{map_over_time_mlp.1} parent=1 // loop_pre_header
      _
    $region3: #{map_over_time_mlp.1} parent=1 // loop_header
      %s14 = sphi 0, %s18
      %p15 = scmp.ge.s32.totalorder %s14, 4
      %s24 = sphi 0, %s26
      %s27 = sphi 0, %s24
      %s28 = sphi 0, %s27
      %s44 = sphi 0, %s28
      %s48 = sphi 0, %s48
      %s50 = sphi 0, %s48
      %s51 = sphi 0, %s50
      %s65 = sphi 0, %s51
      %s69 = sphi 0, %s69
      %s71 = sphi 0, %s69
      %s72 = sphi 0, %s71
      %s86 = sphi 0, %s72
      %s90 = sphi 0, %s90
      %s92 = sphi 0, %s90
      %s93 = sphi 0, %s92
      %s107 = sphi 0, %s93
      %s111 = sphi 0, %s111
      %s113 = sphi 0, %s111
      %s114 = sphi 0, %s113
      %s128 = sphi 0, %s114
      %s134 = sphi 0, %s136
      %s137 = sphi 0, %s134
      %s138 = sphi 0, %s137
      %s154 = sphi 0, %s138
    $region4: #{map_over_time_mlp.1} parent=1 // loop_header_branch
      %17 = sbr.rel (%p15) target = $region8
    $region5: #{map_over_time_mlp.1} parent=1 // loop_body
      %s19 = ssub.s32 %s14, 1
      %s20 = ssub.s32 %s14, 2
      %s21 = sadd.s32 %s14, 1
      %s22 = ssub.s32 %s14, %s21
      %p23 = scmp.eq.s32.totalorder %s22, 0
      %s25 = sadd.s32 %s24, 1
      %s26 = scalar_select %p23, %s24, %s25
      %p29 = pneg %p23
      %p30 = scmp.eq.s32.totalorder %s14, 1
      %p31 = por %p29, %p30
      %p32 = scmp.ne.s32.totalorder %s24, %s27
      %p33 = scmp.eq.s32.totalorder %s14, 0
      %p34 = por %p32, %p33
      %p35 = scmp.ne.s32.totalorder %s24, %s27
      %p36 = scmp.eq.s32.totalorder %s19, 1
      %p37 = por %p35, %p36
      %p38 = scmp.ne.s32.totalorder %s27, %s28
      %p39 = scmp.eq.s32.totalorder %s19, 0
      %p40 = por %p38, %p39
      %p41 = scmp.ne.s32.totalorder %s27, %s28
      %p42 = scmp.eq.s32.totalorder %s20, 1
      %p43 = por %p41, %p42
      %p45 = scmp.ne.s32.totalorder %s28, %s44
      %p46 = scmp.eq.s32.totalorder %s20, 0
      %p47 = por %p45, %p46
      %s49 = sadd.s32 %s48, 1
      %p52 = scmp.eq.s32.totalorder %s14, 1
      %p53 = scmp.ne.s32.totalorder %s48, %s50
      %p54 = scmp.eq.s32.totalorder %s14, 0
      %p55 = por %p53, %p54
      %p56 = scmp.ne.s32.totalorder %s48, %s50
      %p57 = scmp.eq.s32.totalorder %s19, 1
      %p58 = por %p56, %p57
      %p59 = scmp.ne.s32.totalorder %s50, %s51
      %p60 = scmp.eq.s32.totalorder %s19, 0
      %p61 = por %p59, %p60
      %p62 = scmp.ne.s32.totalorder %s50, %s51
      %p63 = scmp.eq.s32.totalorder %s20, 1
      %p64 = por %p62, %p63
      %p66 = scmp.ne.s32.totalorder %s51, %s65
      %p67 = scmp.eq.s32.totalorder %s20, 0
      %p68 = por %p66, %p67
      %s70 = sadd.s32 %s69, 1
      %p73 = scmp.eq.s32.totalorder %s14, 1
      %p74 = scmp.ne.s32.totalorder %s69, %s71
      %p75 = scmp.eq.s32.totalorder %s14, 0
      %p76 = por %p74, %p75
      %p77 = scmp.ne.s32.totalorder %s69, %s71
      %p78 = scmp.eq.s32.totalorder %s19, 1
      %p79 = por %p77, %p78
      %p80 = scmp.ne.s32.totalorder %s71, %s72
      %p81 = scmp.eq.s32.totalorder %s19, 0
      %p82 = por %p80, %p81
      %p83 = scmp.ne.s32.totalorder %s71, %s72
      %p84 = scmp.eq.s32.totalorder %s20, 1
      %p85 = por %p83, %p84
      %p87 = scmp.ne.s32.totalorder %s72, %s86
      %p88 = scmp.eq.s32.totalorder %s20, 0
      %p89 = por %p87, %p88
      %s91 = sadd.s32 %s90, 1
      %p94 = scmp.eq.s32.totalorder %s14, 1
      %p95 = scmp.ne.s32.totalorder %s90, %s92
      %p96 = scmp.eq.s32.totalorder %s14, 0
      %p97 = por %p95, %p96
      %p98 = scmp.ne.s32.totalorder %s90, %s92
      %p99 = scmp.eq.s32.totalorder %s19, 1
      %p100 = por %p98, %p99
      %p101 = scmp.ne.s32.totalorder %s92, %s93
      %p102 = scmp.eq.s32.totalorder %s19, 0
      %p103 = por %p101, %p102
      %p104 = scmp.ne.s32.totalorder %s92, %s93
      %p105 = scmp.eq.s32.totalorder %s20, 1
      %p106 = por %p104, %p105
      %p108 = scmp.ne.s32.totalorder %s93, %s107
      %p109 = scmp.eq.s32.totalorder %s20, 0
      %p110 = por %p108, %p109
      %s112 = sadd.s32 %s111, 1
      %p115 = scmp.eq.s32.totalorder %s14, 1
      %p116 = scmp.ne.s32.totalorder %s111, %s113
      %p117 = scmp.eq.s32.totalorder %s14, 0
      %p118 = por %p116, %p117
      %p119 = scmp.ne.s32.totalorder %s111, %s113
      %p120 = scmp.eq.s32.totalorder %s19, 1
      %p121 = por %p119, %p120
      %p122 = scmp.ne.s32.totalorder %s113, %s114
      %p123 = scmp.eq.s32.totalorder %s19, 0
      %p124 = por %p122, %p123
      %p125 = scmp.ne.s32.totalorder %s113, %s114
      %p126 = scmp.eq.s32.totalorder %s20, 1
      %p127 = por %p125, %p126
      %p129 = scmp.ne.s32.totalorder %s114, %s128
      %p130 = scmp.eq.s32.totalorder %s20, 0
      %p131 = por %p129, %p130
      %s132 = ssub.s32 %s14, %s21
      %p133 = scmp.eq.s32.totalorder %s132, 0
      %s135 = sadd.s32 %s134, 1
      %s136 = scalar_select %p133, %s134, %s135
      %p139 = pneg %p133
      %p140 = scmp.eq.s32.totalorder %s14, 1
      %p141 = por %p139, %p140
      %p142 = scmp.ne.s32.totalorder %s134, %s137
      %p143 = scmp.eq.s32.totalorder %s14, 0
      %p144 = por %p142, %p143
      %p145 = scmp.ne.s32.totalorder %s134, %s137
      %p146 = scmp.eq.s32.totalorder %s19, 1
      %p147 = por %p145, %p146
      %p148 = scmp.ne.s32.totalorder %s137, %s138
      %p149 = scmp.eq.s32.totalorder %s19, 0
      %p150 = por %p148, %p149
      %p151 = scmp.ne.s32.totalorder %s137, %s138
      %p152 = scmp.eq.s32.totalorder %s20, 1
      %p153 = por %p151, %p152
      %p155 = scmp.ne.s32.totalorder %s138, %s154
      %p156 = scmp.eq.s32.totalorder %s20, 0
      %p157 = por %p155, %p156
      %p158 = scmp.le.s32.totalorder 1, %s14
      %p159 = scmp.lt.s32.totalorder %s14, 3
      %p160 = pnand %p158, %p159
      %p161 = pneg %p160
      // Predicated region
      $region9: #{map_over_time_mlp.1} parent=5 // pred_check
        _
      $region10: #{map_over_time_mlp.1} parent=5 // pred_check_branch
        %163 = sbr.rel (%p160) target = $region12
      $region11: #{map_over_time_mlp.1} parent=5 // pred_region
        %s164 = ssub.s32 %s14, 1
        // Predicated region
        $region13: #{map_over_time_mlp.1} parent=11 // pred_check
          %p165 = pneg %p61
        $region14: #{map_over_time_mlp.1} parent=11 // pred_check_branch
          %167 = sbr.rel (%p165) target = $region16
        $region15: #{map_over_time_mlp.1} parent=11 // pred_region
          _
        $region16: #{map_over_time_mlp.1} parent=11 // pred_fallthru
          _
        // Predicated region
        $region17: #{map_over_time_mlp.1} parent=11 // pred_check
          %p168 = pneg %p82
        $region18: #{map_over_time_mlp.1} parent=11 // pred_check_branch
          %170 = sbr.rel (%p168) target = $region20
        $region19: #{map_over_time_mlp.1} parent=11 // pred_region
          _
        $region20: #{map_over_time_mlp.1} parent=11 // pred_fallthru
          _
        // Predicated region
        $region21: #{map_over_time_mlp.1} parent=11 // pred_check
          %p171 = pneg %p103
        $region22: #{map_over_time_mlp.1} parent=11 // pred_check_branch
          %173 = sbr.rel (%p171) target = $region24
        $region23: #{map_over_time_mlp.1} parent=11 // pred_region
          _
        $region24: #{map_over_time_mlp.1} parent=11 // pred_fallthru
          _
        // Predicated region
        $region25: #{map_over_time_mlp.1} parent=11 // pred_check
          %p174 = pneg %p124
        $region26: #{map_over_time_mlp.1} parent=11 // pred_check_branch
          %176 = sbr.rel (%p174) target = $region28
        $region27: #{map_over_time_mlp.1} parent=11 // pred_region
          _
        $region28: #{map_over_time_mlp.1} parent=11 // pred_fallthru
          _
      $region12: #{map_over_time_mlp.1} parent=5 // pred_fallthru
        _
      %p177 = scmp.lt.s32.totalorder %s14, 2
      // Predicated region
      $region29: #{map_over_time_mlp.1} parent=5 // pred_check
        %p178 = pneg %p177
      $region30: #{map_over_time_mlp.1} parent=5 // pred_check_branch
        %180 = sbr.rel (%p178) target = $region32
      $region31: #{map_over_time_mlp.1} parent=5 // pred_region
        // Predicated region
        $region33: #{map_over_time_mlp.1} parent=31 // pred_check
          %p181 = pneg %p34
        $region34: #{map_over_time_mlp.1} parent=31 // pred_check_branch
          %183 = sbr.rel (%p181) target = $region36
        $region35: #{map_over_time_mlp.1} parent=31 // pred_region
          %p184 = scmp.lt.s32.totalorder %s14, 1
          %s185 = scalar_select %p184, %s14, 1
          %s186 = smul.addr %s185, 8
          %s187 = scalar_lea.vmem %s0, %s186
        $region36: #{map_over_time_mlp.1} parent=31 // pred_fallthru
          _
      $region32: #{map_over_time_mlp.1} parent=5 // pred_fallthru
        _
      %p188 = scmp.le.s32.totalorder 1, %s14
      %p189 = scmp.lt.s32.totalorder %s14, 3
      %p190 = pnand %p188, %p189
      %p191 = pneg %p190
      // Predicated region
      $region37: #{map_over_time_mlp.1} parent=5 // pred_check
        _
      $region38: #{map_over_time_mlp.1} parent=5 // pred_check_branch
        %193 = sbr.rel (%p190) target = $region40
      $region39: #{map_over_time_mlp.1} parent=5 // pred_region
        %s194 = ssub.s32 %s14, 1
        %p195 = scmp.lt.s32.totalorder %s19, 1
        %s196 = scalar_select %p195, %s19, 1
        %s197 = smul.addr %s196, 8
        %s198 = scalar_lea.vmem %s0, %s197
        %p199 = pneg %p40
        %p200 = pneg %p37
        %p201 = pneg %p61
        %p202 = pneg %p58
        %p203 = pneg %p82
        %p204 = pneg %p79
        %p205 = pneg %p103
        %p206 = pneg %p100
        %p207 = pneg %p124
        %p208 = pneg %p121
        %p209 = pneg %p150
        %p210 = pneg %p147
        %s211 = sand.u32 %s137, 1
        %s212 = scalar_lea.sflag [#allocation3], %s211
        %s213 = sand.u32 %s137, 1
        %s214 = smul.addr %s213, 8
        %s215 = scalar_lea.vmem [#allocation2], %s214
        %p216 = scmp.lt.s32.totalorder %s19, 1
        %s217 = scalar_select %p216, %s19, 1
        %s218 = smul.addr %s217, 8
        %s219 = scalar_lea.vmem %s0, %s218
        %v221 = vld [vmem:[%s219] sm:$0xff]
        %v222 = vpack.c.bf16 %v221, %v221
        %v223 = vld [vmem:[%s1] sm:$0xff]
        %v224 = vld [vmem:[%s1 + $0x8] sm:$0xff]
        %v225 = vld [vmem:[%s1 + $0x10] sm:$0xff]
        %v226 = vld [vmem:[%s1 + $0x18] sm:$0xff]
        %v227 = vld [vmem:[%s1 + $0x20] sm:$0xff]
        %v228 = vld [vmem:[%s1 + $0x28] sm:$0xff]
        %v229 = vld [vmem:[%s1 + $0x30] sm:$0xff]
        %v230 = vld [vmem:[%s1 + $0x38] sm:$0xff]
        %v231 = vld [vmem:[%s1 + $0x40] sm:$0xff]
        %v232 = vld [vmem:[%s1 + $0x48] sm:$0xff]
        %v233 = vld [vmem:[%s1 + $0x50] sm:$0xff]
        %v234 = vld [vmem:[%s1 + $0x58] sm:$0xff]
        %v235 = vld [vmem:[%s1 + $0x60] sm:$0xff]
        %v236 = vld [vmem:[%s1 + $0x68] sm:$0xff]
        %v237 = vld [vmem:[%s1 + $0x70] sm:$0xff]
        %v238 = vld [vmem:[%s1 + $0x78] sm:$0xff]
        %v239 = vld [vmem:[%s2] sm:$0x3]
        %v241 = vlaneseq
        %v242 = vshrl.u32 %v241, 7
        %v243 = vsub.s32 0, %v242
        %v244 = vrot.slane %v239, %v243
        %v245 = vlaneseq
        %v246 = vshrl.u32 %v245, 7
        %v247 = vsub.s32 1, %v246
        %v248 = vrot.slane %v239, %v247
        %v267 = vunpack.c.l.b16 %v223
        %v268 = vunpack.c.h.b16 %v223
        %v269 = vunpack.c.l.b16 %v224
        %v270 = vunpack.c.h.b16 %v224
        %v271 = vunpack.c.l.b16 %v225
        %v272 = vunpack.c.h.b16 %v225
        %v273 = vunpack.c.l.b16 %v226
        %v274 = vunpack.c.h.b16 %v226
        %v275 = vunpack.c.l.b16 %v227
        %v276 = vunpack.c.h.b16 %v227
        %v277 = vunpack.c.l.b16 %v228
        %v278 = vunpack.c.h.b16 %v228
        %v279 = vunpack.c.l.b16 %v229
        %v280 = vunpack.c.h.b16 %v229
        %v281 = vunpack.c.l.b16 %v230
        %v282 = vunpack.c.h.b16 %v230
        %v283 = vunpack.c.l.b16 %v231
        %v284 = vunpack.c.h.b16 %v231
        %v285 = vunpack.c.l.b16 %v232
        %v286 = vunpack.c.h.b16 %v232
        %v287 = vunpack.c.l.b16 %v233
        %v288 = vunpack.c.h.b16 %v233
        %v289 = vunpack.c.l.b16 %v234
        %v290 = vunpack.c.h.b16 %v234
        %v291 = vunpack.c.l.b16 %v235
        %v292 = vunpack.c.h.b16 %v235
        %v293 = vunpack.c.l.b16 %v236
        %v294 = vunpack.c.h.b16 %v236
        %v295 = vunpack.c.l.b16 %v237
        %v296 = vunpack.c.h.b16 %v237
        %v297 = vunpack.c.l.b16 %v238
        %v298 = vunpack.c.h.b16 %v238
        %v299 = vpack.c.b16 %v269, %v267
        %v300 = vpack.c.b16 %v270, %v268
        %v301 = vpack.c.b16 %v273, %v271
        %v302 = vpack.c.b16 %v274, %v272
        %v303 = vpack.c.b16 %v277, %v275
        %v304 = vpack.c.b16 %v278, %v276
        %v305 = vpack.c.b16 %v281, %v279
        %v306 = vpack.c.b16 %v282, %v280
        %v307 = vpack.c.b16 %v285, %v283
        %v308 = vpack.c.b16 %v286, %v284
        %v309 = vpack.c.b16 %v289, %v287
        %v310 = vpack.c.b16 %v290, %v288
        %v311 = vpack.c.b16 %v293, %v291
        %v312 = vpack.c.b16 %v294, %v292
        %v313 = vpack.c.b16 %v297, %v295
        %v314 = vpack.c.b16 %v298, %v296
        %331 = vmatprep.subr.bf16.mxu0 %v314
        %332 = vmatpush1.bf16.msra.mxu0 %v313
        %333 = vmatprep.subr.bf16.mxu0 %v312
        %334 = vmatpush1.bf16.msra.mxu0 %v311
        %335 = vmatprep.subr.bf16.mxu0 %v310
        %336 = vmatpush1.bf16.msra.mxu0 %v309
        %337 = vmatprep.subr.bf16.mxu0 %v308
        %338 = vmatpush1.bf16.msra.mxu0 %v307
        %339 = vmatprep.subr.bf16.mxu0 %v306
        %340 = vmatpush1.bf16.msra.mxu0 %v305
        %341 = vmatprep.subr.bf16.mxu0 %v304
        %342 = vmatpush1.bf16.msra.mxu0 %v303
        %343 = vmatprep.subr.bf16.mxu0 %v302
        %344 = vmatpush1.bf16.msra.mxu0 %v301
        %345 = vmatprep.subr.bf16.mxu0 %v300
        %346 = vmatpush1.bf16.msra.mxu0 %v299
        %347 = vmatprep.subr.bf16.mxu0 0
        %348 = vmatpush2.bf16.msra.mxu0 0
        %349 = vmatprep.subr.bf16.mxu0 0
        %350 = vmatpush2.bf16.msra.mxu0 0
        %351 = vmatprep.subr.bf16.mxu0 0
        %352 = vmatpush2.bf16.msra.mxu0 0
        %353 = vmatprep.subr.bf16.mxu0 0
        %354 = vmatpush2.bf16.msra.mxu0 0
        %355 = vmatprep.subr.bf16.mxu0 0
        %356 = vmatpush2.bf16.msra.mxu0 0
        %357 = vmatprep.subr.bf16.mxu0 0
        %358 = vmatpush2.bf16.msra.mxu0 0
        %359 = vmatprep.subr.bf16.mxu0 0
        %360 = vmatpush2.bf16.msra.mxu0 0
        %361 = vmatprep.subr.bf16.mxu0 0
        %362 = vmatpush2.bf16.msra.mxu0 0
        %363 = vmatprep.mubr.bf16.mxu0 0
        %364 = vmatmul.mubr.bf16.gmra.mxu0 %v222
        %v365 = vpop.f32.mrf.mxu0
        %v366 = vadd.f32 %v244, %v365
        %v367 = vpop.f32.mrf.mxu0
        %v368 = vadd.f32 %v248, %v367
        %v369 = vpop.f32.mrf.mxu0
        %v370 = vpop.f32.mrf.mxu0
        %371 = vdwg.mxu0
        %v372 = vmul.f32 %v366, %v366
        %v373 = vmul.f32 %v368, %v368
        %v374 = vmul.f32 %v366, %v372
        %v375 = vmul.f32 %v368, %v373
        %v376 = vmul.f32 %v374, 0.044715
        %v377 = vmul.f32 %v375, 0.044715
        %v378 = vadd.f32 %v366, %v376
        %v379 = vadd.f32 %v368, %v377
        %v380 = vmul.f32 %v378, 0.7978846
        %v381 = vmul.f32 %v379, 0.7978846
        %v382 = vtanh.pop %v380
        %v383 = vtanh.pop %v381
        %v384 = vadd.f32 %v382, 1.0
        %v385 = vadd.f32 %v383, 1.0
        %v386 = vmul.f32 %v384, 0.5
        %v387 = vmul.f32 %v385, 0.5
        %v388 = vmul.f32 %v366, %v386
        %v389 = vmul.f32 %v368, %v387
        %v390 = vpack.c.bf16 %v388, %v388
        %v391 = vpack.c.bf16 %v389, %v389
        %v392 = vld [vmem:[%s3] sm:$0xf]
        %v393 = vld [vmem:[%s3 + $0x4] sm:$0xf]
        %v394 = vld [vmem:[%s3 + $0x8] sm:$0xf]
        %v395 = vld [vmem:[%s3 + $0xc] sm:$0xf]
        %v396 = vld [vmem:[%s3 + $0x10] sm:$0xf]
        %v397 = vld [vmem:[%s3 + $0x14] sm:$0xf]
        %v398 = vld [vmem:[%s3 + $0x18] sm:$0xf]
        %v399 = vld [vmem:[%s3 + $0x1c] sm:$0xf]
        %v400 = vld [vmem:[%s3 + $0x20] sm:$0xf]
        %v401 = vld [vmem:[%s3 + $0x24] sm:$0xf]
        %v402 = vld [vmem:[%s3 + $0x28] sm:$0xf]
        %v403 = vld [vmem:[%s3 + $0x2c] sm:$0xf]
        %v404 = vld [vmem:[%s3 + $0x30] sm:$0xf]
        %v405 = vld [vmem:[%s3 + $0x34] sm:$0xf]
        %v406 = vld [vmem:[%s3 + $0x38] sm:$0xf]
        %v407 = vld [vmem:[%s3 + $0x3c] sm:$0xf]
        %v408 = vld [vmem:[%s3 + $0x40] sm:$0xf]
        %v409 = vld [vmem:[%s3 + $0x44] sm:$0xf]
        %v410 = vld [vmem:[%s3 + $0x48] sm:$0xf]
        %v411 = vld [vmem:[%s3 + $0x4c] sm:$0xf]
        %v412 = vld [vmem:[%s3 + $0x50] sm:$0xf]
        %v413 = vld [vmem:[%s3 + $0x54] sm:$0xf]
        %v414 = vld [vmem:[%s3 + $0x58] sm:$0xf]
        %v415 = vld [vmem:[%s3 + $0x5c] sm:$0xf]
        %v416 = vld [vmem:[%s3 + $0x60] sm:$0xf]
        %v417 = vld [vmem:[%s3 + $0x64] sm:$0xf]
        %v418 = vld [vmem:[%s3 + $0x68] sm:$0xf]
        %v419 = vld [vmem:[%s3 + $0x6c] sm:$0xf]
        %v420 = vld [vmem:[%s3 + $0x70] sm:$0xf]
        %v421 = vld [vmem:[%s3 + $0x74] sm:$0xf]
        %v422 = vld [vmem:[%s3 + $0x78] sm:$0xf]
        %v423 = vld [vmem:[%s3 + $0x7c] sm:$0xf]
        %v424 = vld [vmem:[%s4] sm:$0x1]
        %v426 = vlaneseq
        %v427 = vshrl.u32 %v426, 7
        %v428 = vsub.s32 0, %v427
        %v429 = vrot.slane %v424, %v428
        %v463 = vunpack.c.l.b16 %v392
        %v464 = vunpack.c.l.b16 %v393
        %v465 = vunpack.c.l.b16 %v394
        %v466 = vunpack.c.l.b16 %v395
        %v467 = vunpack.c.l.b16 %v396
        %v468 = vunpack.c.l.b16 %v397
        %v469 = vunpack.c.l.b16 %v398
        %v470 = vunpack.c.l.b16 %v399
        %v471 = vunpack.c.l.b16 %v400
        %v472 = vunpack.c.l.b16 %v401
        %v473 = vunpack.c.l.b16 %v402
        %v474 = vunpack.c.l.b16 %v403
        %v475 = vunpack.c.l.b16 %v404
        %v476 = vunpack.c.l.b16 %v405
        %v477 = vunpack.c.l.b16 %v406
        %v478 = vunpack.c.l.b16 %v407
        %v479 = vunpack.c.l.b16 %v408
        %v480 = vunpack.c.l.b16 %v409
        %v481 = vunpack.c.l.b16 %v410
        %v482 = vunpack.c.l.b16 %v411
        %v483 = vunpack.c.l.b16 %v412
        %v484 = vunpack.c.l.b16 %v413
        %v485 = vunpack.c.l.b16 %v414
        %v486 = vunpack.c.l.b16 %v415
        %v487 = vunpack.c.l.b16 %v416
        %v488 = vunpack.c.l.b16 %v417
        %v489 = vunpack.c.l.b16 %v418
        %v490 = vunpack.c.l.b16 %v419
        %v491 = vunpack.c.l.b16 %v420
        %v492 = vunpack.c.l.b16 %v421
        %v493 = vunpack.c.l.b16 %v422
        %v494 = vunpack.c.l.b16 %v423
        %v495 = vpack.c.b16 %v464, %v463
        %v496 = vpack.c.b16 %v466, %v465
        %v497 = vpack.c.b16 %v468, %v467
        %v498 = vpack.c.b16 %v470, %v469
        %v499 = vpack.c.b16 %v472, %v471
        %v500 = vpack.c.b16 %v474, %v473
        %v501 = vpack.c.b16 %v476, %v475
        %v502 = vpack.c.b16 %v478, %v477
        %v503 = vpack.c.b16 %v480, %v479
        %v504 = vpack.c.b16 %v482, %v481
        %v505 = vpack.c.b16 %v484, %v483
        %v506 = vpack.c.b16 %v486, %v485
        %v507 = vpack.c.b16 %v488, %v487
        %v508 = vpack.c.b16 %v490, %v489
        %v509 = vpack.c.b16 %v492, %v491
        %v510 = vpack.c.b16 %v494, %v493
        %527 = vmatprep.subr.bf16.mxu0 0
        %528 = vmatpush1.bf16.msra.mxu0 %v502
        %529 = vmatprep.subr.bf16.mxu0 0
        %530 = vmatpush1.bf16.msra.mxu0 %v501
        %531 = vmatprep.subr.bf16.mxu0 0
        %532 = vmatpush1.bf16.msra.mxu0 %v500
        %533 = vmatprep.subr.bf16.mxu0 0
        %534 = vmatpush1.bf16.msra.mxu0 %v499
        %535 = vmatprep.subr.bf16.mxu0 0
        %536 = vmatpush1.bf16.msra.mxu0 %v498
        %537 = vmatprep.subr.bf16.mxu0 0
        %538 = vmatpush1.bf16.msra.mxu0 %v497
        %539 = vmatprep.subr.bf16.mxu0 0
        %540 = vmatpush1.bf16.msra.mxu0 %v496
        %541 = vmatprep.subr.bf16.mxu0 0
        %542 = vmatpush1.bf16.msra.mxu0 %v495
        %543 = vmatprep.subr.bf16.mxu0 0
        %544 = vmatpush2.bf16.msra.mxu0 %v510
        %545 = vmatprep.subr.bf16.mxu0 0
        %546 = vmatpush2.bf16.msra.mxu0 %v509
        %547 = vmatprep.subr.bf16.mxu0 0
        %548 = vmatpush2.bf16.msra.mxu0 %v508
        %549 = vmatprep.subr.bf16.mxu0 0
        %550 = vmatpush2.bf16.msra.mxu0 %v507
        %551 = vmatprep.subr.bf16.mxu0 0
        %552 = vmatpush2.bf16.msra.mxu0 %v506
        %553 = vmatprep.subr.bf16.mxu0 0
        %554 = vmatpush2.bf16.msra.mxu0 %v505
        %555 = vmatprep.subr.bf16.mxu0 0
        %556 = vmatpush2.bf16.msra.mxu0 %v504
        %557 = vmatprep.subr.bf16.mxu0 0
        %558 = vmatpush2.bf16.msra.mxu0 %v503
        %559 = vmatprep.mubr.bf16.mxu0 %v391
        %560 = vmatmul.mubr.bf16.gmra.mxu0 %v390
        %v561 = vpop.f32.mrf.mxu0
        %v562 = vadd.f32 %v429, %v561
        %v563 = vpop.f32.mrf.mxu0
        %v564 = vpop.f32.mrf.mxu0
        %v565 = vpop.f32.mrf.mxu0
        %566 = vdwg.mxu0
        %567 = vst [vmem:[%s215] sm:$0xff] %v562
        %s568 = sand.u32 %s137, 1
        %s569 = scalar_lea.sflag [#allocation3], %s568
        %s570 = sand.u32 %s137, 1
        %s571 = smul.addr %s570, 8
        %s572 = scalar_lea.vmem [#allocation2], %s571
        // Predicated region
        $region41: #{map_over_time_mlp.1} parent=39 // pred_check
          %p573 = pneg %p147
        $region42: #{map_over_time_mlp.1} parent=39 // pred_check_branch
          %575 = sbr.rel (%p573) target = $region44
        $region43: #{map_over_time_mlp.1} parent=39 // pred_region
          %s577 = ssub.s32 128, 128
          %578 = vsyncadd %s569, %s577
          %s579 = smul.addr %s19, 128
          %s580 = scalar_lea.hbm %s5, %s579
          %s582 = sshll.u32 %s572, 4
          %s583 = int_to_ptr.vmem [resolvable:$true] %s582
          %585 = dma.vmem_to_hbm [thread:$0]  %s583, 128, %s580, %s569
        $region44: #{map_over_time_mlp.1} parent=39 // pred_fallthru
          _
      $region40: #{map_over_time_mlp.1} parent=5 // pred_fallthru
        _
      %p586 = scmp.le.s32.totalorder 2, %s14
      // Predicated region
      $region45: #{map_over_time_mlp.1} parent=5 // pred_check
        %p587 = pneg %p586
      $region46: #{map_over_time_mlp.1} parent=5 // pred_check_branch
        %589 = sbr.rel (%p587) target = $region48
      $region47: #{map_over_time_mlp.1} parent=5 // pred_region
        %s590 = ssub.s32 %s14, 2
        // Predicated region
        $region49: #{map_over_time_mlp.1} parent=47 // pred_check
          %p591 = pneg %p153
        $region50: #{map_over_time_mlp.1} parent=47 // pred_check_branch
          %593 = sbr.rel (%p591) target = $region52
        $region51: #{map_over_time_mlp.1} parent=47 // pred_region
          %s594 = sand.u32 %s138, 1
          %s595 = scalar_lea.sflag [#allocation3], %s594
          %s596 = sand.u32 %s138, 1
          %s597 = smul.addr %s596, 8
          %s598 = scalar_lea.vmem [#allocation2], %s597
          %599 = dma.done %s595, 128
        $region52: #{map_over_time_mlp.1} parent=47 // pred_fallthru
          _
      $region48: #{map_over_time_mlp.1} parent=5 // pred_fallthru
        _
    $region6: #{map_over_time_mlp.1} parent=1 // loop_footer
      %s18 = sadd.s32 1, %s14
    $region7: #{map_over_time_mlp.1} parent=1 // loop_footer_branch
      %13 = sbr.rel target = $region3
    $region8: #{map_over_time_mlp.1} parent=1 // loop_exit
      _
    %600 = vsyncpa [#allocation3], 1
    %s601 = scalar_lea.sflag [#allocation3], 1
    %602 = vsyncpa %s601, 1

</llo_original>
